<compile_context>
chip_gen: v6e
topology: v6e:2x2x1
jax: 0.10.0
libtpu: 0.0.40
codegen_flags: <defaults>
</compile_context>

<pallas_src>
import functools

import jax
import jax.numpy as jnp
from jax.experimental import pallas as pl
from jax.experimental.pallas import tpu as pltpu

_MiB = 1024 * 1024


def _round_up(x, m):
    return ((x + m - 1) // m) * m


def _vmem_plan():
    """Per-generation (budget_for_tiles, vmem_limit_bytes)."""
    try:
        phys = int(pltpu.get_tpu_info().vmem_capacity_bytes)
    except Exception:
        phys = 64 * _MiB  # conservative fallback: v7x per-TensorCore VMEM
    if phys <= 64 * _MiB:            # v7x: 64 MiB physical per TC
        budget, limit = 32 * _MiB, 48 * _MiB
    else:                            # v5e / v6e: 128 MiB physical
        budget, limit = 48 * _MiB, 64 * _MiB
    limit = max(16 * _MiB, min(limit, phys - 8 * _MiB))
    return budget, limit


def _choose_tile_n(n, c, itemsize, row_align, budget_bytes):
    # Real per-row VMEM working set for one grid step:
    #   * double-buffered native-dtype pred tile:      2 * c * itemsize
    #   * in-kernel f32 copies (cast + weighted/exp):  2 * c * 4
    #   * double-buffered (tile_n, 1) int32 target tile, lane-padded to 128.
    per_row = 2 * c * itemsize + 2 * c * 4 + 2 * 128 * 4
    cap = max(row_align, budget_bytes // per_row)
    if cap >= n:
        return n                      # single full-extent block, no masking
    return max(row_align, (cap // row_align) * row_align)


def _label_smoothing_kernel(pred_ref, tgt_ref, out_ref, *,
                            confidence, smooth_val, n_valid, tile_n,
                            needs_mask):
    pred_in = pred_ref[...]                       # (T, C) native dtype
    tgt = tgt_ref[...]                            # (T, 1) int32

    # Row max in the native dtype (exact; bf16 VPU path on v6e/v7x).
    m = jnp.max(pred_in, axis=-1, keepdims=True).astype(jnp.float32)   # (T,1)
    pred = pred_in.astype(jnp.float32)                                  # (T,C)

    # Stable logsumexp pieces (no (T, C) logp materialized).
    lse = jnp.log(jnp.sum(jnp.exp(pred - m), axis=-1, keepdims=True))  # (T,1)

    # Fused weighted reduction. sum_c(w) == 1  =>  per_row = (m+lse) - wsum.
    cls_ids = jax.lax.broadcasted_iota(jnp.int32, pred.shape, 1)       # (T,C)
    w = jnp.where(cls_ids == tgt,
                  jnp.float32(confidence), jnp.float32(smooth_val))    # (T,C)
    wsum = jnp.sum(w * pred, axis=-1, keepdims=True)                   # (T,1)

    per_row = (m + lse) - wsum                                         # (T,1)

    if needs_mask:  # static: emitted only when the last block is ragged
        i = pl.program_id(0)
        row_ids = i * tile_n + jax.lax.broadcasted_iota(
            jnp.int32, per_row.shape, 0)
        # Select (not multiply): garbage rows may carry inf/NaN.
        per_row = jnp.where(row_ids < n_valid, per_row, jnp.float32(0.0))

    out_ref[...] = jnp.sum(per_row, keepdims=True).reshape(1, 1, 1)


def label_smoothing_loss(pred, target, *, classes, smoothing=0.0, tile_n=None):
    """Pallas TPU implementation of LabelSmoothingLoss.forward (dim=-1)."""
    n, c = pred.shape
    assert c == classes
    assert classes >= 2, "smoothing/(classes-1) requires classes >= 2"

    confidence = 1.0 - smoothing
    smooth_val = smoothing / (classes - 1)

    # bf16/f16 pack 16 rows per sublane tile; f32 packs 8.
    itemsize = jnp.dtype(pred.dtype).itemsize
    row_align = 16 if itemsize == 2 else 8
    budget, vmem_limit = _vmem_plan()
    if tile_n is None:
        tile_n = _choose_tile_n(n, c, itemsize, row_align, budget)
    else:
        tile_n = n if tile_n >= n else max(row_align,
                                           _round_up(tile_n, row_align))

    num_tiles = pl.cdiv(n, tile_n)
    needs_mask = (n % tile_n) != 0    # ragged last block -> in-kernel select

    # No host-side pad or cast of pred: the native tensor streams from HBM.
    tgt2d = target.astype(jnp.int32).reshape(n, 1)

    kernel = functools.partial(
        _label_smoothing_kernel,
        confidence=confidence, smooth_val=smooth_val,
        n_valid=n, tile_n=tile_n, needs_mask=needs_mask)

    partial_sums = pl.pallas_call(
        kernel,
        out_shape=jax.ShapeDtypeStruct((num_tiles, 1, 1), jnp.float32),
        grid_spec=pltpu.PrefetchScalarGridSpec(
            num_scalar_prefetch=0,
            grid=(num_tiles,),
            in_specs=[
                pl.BlockSpec((tile_n, c), lambda i: (i, 0)),   # pred row tile
                pl.BlockSpec((tile_n, 1), lambda i: (i, 0)),   # target rows
            ],
            # Per-tile partial sum -> no resident accumulator, axis can be
            # parallel (v7x 2-TC sharding); reduced outside the kernel.
            out_specs=pl.BlockSpec((1, 1, 1), lambda i: (i, 0, 0)),
        ),
        compiler_params=pltpu.CompilerParams(
            dimension_semantics=("parallel",),
            vmem_limit_bytes=int(vmem_limit)),
    )(pred, tgt2d)

    return jnp.sum(partial_sums) / jnp.float32(n)


def _reference(pred, target, classes, smoothing):
    # Pure-JAX reference mirroring the PyTorch module.
    logp = jax.nn.log_softmax(pred.astype(jnp.float32), axis=-1)
    confidence = 1.0 - smoothing
    true_dist = jnp.full_like(logp, smoothing / (classes - 1))
    true_dist = true_dist.at[jnp.arange(pred.shape[0]), target].set(confidence)
    return jnp.mean(jnp.sum(-true_dist * logp, axis=-1))


if __name__ == "__main__":
    key = jax.random.PRNGKey(0)
    k1, k2, k3, k4, k5 = jax.random.split(key, 5)

    # Case 1: f32, batch not a multiple of the tile -> exercises multi-step
    # grid, the per-tile partial outputs and ragged-last-block masking
    # (tile_n=8 -> 3 grid steps, last block rows 20..23 masked).
    batch, classes, smoothing = 20, 32, 0.1
    pred = jax.random.normal(k1, (batch, classes), dtype=jnp.float32)
    target = jax.random.randint(k2, (batch,), 0, classes, dtype=jnp.int32)
    loss = label_smoothing_loss(pred, target, classes=classes,
                                smoothing=smoothing, tile_n=8)
    loss = jax.block_until_ready(loss)
    ref = _reference(pred, target, classes, smoothing)
    assert jnp.allclose(loss, ref, atol=1e-5, rtol=1e-5), (loss, ref)

    # Case 2: bf16 input streamed with no host-side f32 cast, auto tile size
    # (single full-extent block, no masking).
    batch2, classes2, smoothing2 = 16, 128, 0.2
    pred_bf16 = jax.random.normal(k3, (batch2, classes2),
                                  dtype=jnp.float32).astype(jnp.bfloat16)
    target2 = jax.random.randint(k2, (batch2,), 0, classes2, dtype=jnp.int32)
    loss2 = label_smoothing_loss(pred_bf16, target2, classes=classes2,
                                 smoothing=smoothing2)
    loss2 = jax.block_until_ready(loss2)
    ref2 = _reference(pred_bf16, target2, classes2, smoothing2)
    assert jnp.allclose(loss2, ref2, atol=1e-4, rtol=1e-4), (loss2, ref2)

    # Case 3: bf16, unaligned batch with multiple tiles (grid=3, ragged last
    # block, bf16-native row max) -- no host-side padding of pred.
    batch3, classes3, smoothing3 = 40, 256, 0.1
    pred3 = jax.random.normal(k4, (batch3, classes3),
                              dtype=jnp.float32).astype(jnp.bfloat16)
    target3 = jax.random.randint(k5, (batch3,), 0, classes3, dtype=jnp.int32)
    loss3 = label_smoothing_loss(pred3, target3, classes=classes3,
                                 smoothing=smoothing3, tile_n=16)
    loss3 = jax.block_until_ready(loss3)
    ref3 = _reference(pred3, target3, classes3, smoothing3)
    assert jnp.allclose(loss3, ref3, atol=1e-4, rtol=1e-4), (loss3, ref3)

    print("KERNEL_OK")
</pallas_src>

<mosaic_0001>
module attributes {stable_mosaic.version = 11 : i64} {
  func.func @_label_smoothing_kernel(%arg0: i32, %arg1: memref<8x32xf32, #tpu.memory_space<vmem>>, %arg2: memref<8x1xi32, #tpu.memory_space<vmem>>, %arg3: memref<1x1x1xf32, #tpu.memory_space<vmem>>) attributes {dimension_semantics = [#tpu.dimension_semantics<parallel>], iteration_bounds = array<i64: 3>, scalar_prefetch = 0 : i64, scratch_operands = 0 : i64, tpu.core_type = #tpu.core_type<tc>, window_params = [{transform_indices = @transform_0, window_bounds = array<i64: 8, 32>}, {transform_indices = @transform_1, window_bounds = array<i64: 8, 1>}, {transform_indices = @transform_2, window_bounds = array<i64: 1, 1, 1>}]} {
    %c0 = arith.constant 0 : index
    %c0_0 = arith.constant 0 : index
    %0 = vector.load %arg1[%c0, %c0_0] : memref<8x32xf32, #tpu.memory_space<vmem>>, vector<8x32xf32>
    %c0_1 = arith.constant 0 : index
    %c0_2 = arith.constant 0 : index
    %1 = vector.load %arg2[%c0_1, %c0_2] : memref<8x1xi32, #tpu.memory_space<vmem>>, vector<8x1xi32>
    %cst = arith.constant dense<0xFF800000> : vector<8xf32>
    %2 = vector.multi_reduction <maximumf>, %0, %cst [1] : vector<8x32xf32> to vector<8xf32>
    %3 = vector.shape_cast %2 : vector<8xf32> to vector<8x1xf32>
    %4 = vector.broadcast %3 : vector<8x1xf32> to vector<8x32xf32>
    %5 = arith.subf %0, %4 : vector<8x32xf32>
    %6 = math.exp %5 : vector<8x32xf32>
    %cst_3 = arith.constant dense<0.000000e+00> : vector<8xf32>
    %7 = vector.multi_reduction <add>, %6, %cst_3 [1] : vector<8x32xf32> to vector<8xf32>
    %8 = vector.shape_cast %7 : vector<8xf32> to vector<8x1xf32>
    %9 = math.log %8 : vector<8x1xf32>
    %10 = tpu.iota {dimensions = array<i32: 1>} : vector<8x32xi32>
    %11 = vector.broadcast %1 : vector<8x1xi32> to vector<8x32xi32>
    %12 = arith.cmpi eq, %10, %11 : vector<8x32xi32>
    %cst_4 = arith.constant 0.899999976 : f32
    %cst_5 = arith.constant 0.0032258064 : f32
    %13 = vector.broadcast %cst_4 : f32 to vector<8x32xf32>
    %14 = vector.broadcast %cst_5 : f32 to vector<8x32xf32>
    %15 = arith.select %12, %13, %14 : vector<8x32xi1>, vector<8x32xf32>
    %16 = arith.mulf %15, %0 : vector<8x32xf32>
    %cst_6 = arith.constant dense<0.000000e+00> : vector<8xf32>
    %17 = vector.multi_reduction <add>, %16, %cst_6 [1] : vector<8x32xf32> to vector<8xf32>
    %18 = vector.shape_cast %17 : vector<8xf32> to vector<8x1xf32>
    %19 = arith.addf %3, %9 : vector<8x1xf32>
    %20 = arith.subf %19, %18 : vector<8x1xf32>
    %c8_i32 = arith.constant 8 : i32
    %21 = arith.muli %arg0, %c8_i32 : i32
    %22 = tpu.iota {dimensions = array<i32: 0>} : vector<8x1xi32>
    %23 = vector.broadcast %21 : i32 to vector<8x1xi32>
    %24 = arith.addi %23, %22 : vector<8x1xi32>
    %c20_i32 = arith.constant 20 : i32
    %25 = vector.broadcast %c20_i32 : i32 to vector<8x1xi32>
    %26 = arith.cmpi slt, %24, %25 : vector<8x1xi32>
    %cst_7 = arith.constant 0.000000e+00 : f32
    %27 = vector.broadcast %cst_7 : f32 to vector<8x1xf32>
    %28 = arith.select %26, %20, %27 : vector<8x1xi1>, vector<8x1xf32>
    %29 = vector.shape_cast %28 : vector<8x1xf32> to vector<1x8x1xf32>
    %cst_8 = arith.constant dense<0.000000e+00> : vector<1xf32>
    %30 = vector.multi_reduction <add>, %29, %cst_8 [1, 2] : vector<1x8x1xf32> to vector<1xf32>
    %31 = vector.shape_cast %30 : vector<1xf32> to vector<1x1x1xf32>
    %32 = vector.extract %31[0, 0, 0] : f32 from vector<1x1x1xf32>
    %33 = vector.broadcast %32 : f32 to vector<1x1xf32>
    %34 = vector.shape_cast %33 : vector<1x1xf32> to vector<1x1x1xf32>
    %c0_9 = arith.constant 0 : index
    %c0_10 = arith.constant 0 : index
    %c0_11 = arith.constant 0 : index
    %35 = vector.load %arg3[%c0_9, %c0_10, %c0_11] : memref<1x1x1xf32, #tpu.memory_space<vmem>>, vector<1x1x1xf32>
    tpu.vector_store %arg3[%c0_9, %c0_10, %c0_11], %34 {strides = array<i32>} : memref<1x1x1xf32, #tpu.memory_space<vmem>>, vector<1x1x1xf32>,
    return
  }
  func.func @transform_0(%arg0: i32) -> (i32, i32) {
    %c0_i32 = arith.constant 0 : i32
    %c0_i32_0 = arith.constant 0 : i32
    return %arg0, %c0_i32 : i32, i32
  }
  func.func @transform_1(%arg0: i32) -> (i32, i32) {
    %c0_i32 = arith.constant 0 : i32
    %c0_i32_0 = arith.constant 0 : i32
    return %arg0, %c0_i32 : i32, i32
  }
  func.func @transform_2(%arg0: i32) -> (i32, i32, i32) {
    %c0_i32 = arith.constant 0 : i32
    %c0_i32_0 = arith.constant 0 : i32
    %c0_i32_1 = arith.constant 0 : i32
    return %arg0, %c0_i32, %c0_i32_0 : i32, i32, i32
  }
}

</mosaic_0001>

<llo_original>
// kernel: tpu_custom_call.1
$region0: #{tpu_custom_call.1}
  #allocation0 [shape = 'u32[]', space=smem, size = 0x4, offset = 0x4, fixed_abs, tag = 'smem constant byte address 0x4 - core index']
  #allocation1 [shape = 'u32[144,128]{1,0:T(1,128)}', space=vmem, size = 0x12000, scoped, tag = 'internal scratch']
  %s0 = inlined_call_operand.vmem [shape: f32[20,32], index: 0, kind: input, shape index: {}]
  %s1 = inlined_call_operand.vmem [shape: s32[20,1], index: 1, kind: input, shape index: {}]
  %s2 = inlined_call_operand.vmem [shape: f32[3,1,1], index: 2, kind: output, shape index: {}]
  %s3 = sld [smem:[#allocation0]]
  $region41: #{tpu_custom_call.1} parent=0
    _
  %s5 = ssub.s32 1, %s3
  %s6 = scalar_select 0, %s5, %s3
  loop: start=0, step=1, limit=5
  $region2: #{tpu_custom_call.1} parent=0 // loop_pre_header
    _
  $region3: #{tpu_custom_call.1} parent=0 // loop_header
    %s8 = sphi 0, %s12
    %p9 = scmp.ge.s32.totalorder %s8, 5
    %s18 = sphi 0, %s20
    %s21 = sphi 0, %s18
    %s22 = sphi 0, %s21
    %s38 = sphi 0, %s22
    %s44 = sphi 0, %s46
    %s47 = sphi 0, %s44
    %s48 = sphi 0, %s47
    %s64 = sphi 0, %s48
    %s70 = sphi 0, %s72
    %s73 = sphi 0, %s70
    %s74 = sphi 0, %s73
    %s90 = sphi 0, %s74
  $region4: #{tpu_custom_call.1} parent=0 // loop_header_branch
    %11 = sbr.rel (%p9) target = $region8
  $region5: #{tpu_custom_call.1} parent=0 // loop_body
    %s13 = ssub.s32 %s8, 1
    %s14 = ssub.s32 %s8, 2
    %s15 = sadd.s32 %s8, 1
    %s16 = ssub.s32 %s8, %s15
    %p17 = scmp.eq.s32.totalorder %s16, 0
    %s19 = sadd.s32 %s18, 1
    %s20 = scalar_select %p17, %s18, %s19
    %p23 = pneg %p17
    %p24 = scmp.eq.s32.totalorder %s8, 2
    %p25 = por %p23, %p24
    %p26 = scmp.ne.s32.totalorder %s18, %s21
    %p27 = scmp.eq.s32.totalorder %s8, 0
    %p28 = por %p26, %p27
    %p29 = scmp.ne.s32.totalorder %s18, %s21
    %p30 = scmp.eq.s32.totalorder %s13, 2
    %p31 = por %p29, %p30
    %p32 = scmp.ne.s32.totalorder %s21, %s22
    %p33 = scmp.eq.s32.totalorder %s13, 0
    %p34 = por %p32, %p33
    %p35 = scmp.ne.s32.totalorder %s21, %s22
    %p36 = scmp.eq.s32.totalorder %s14, 2
    %p37 = por %p35, %p36
    %p39 = scmp.ne.s32.totalorder %s22, %s38
    %p40 = scmp.eq.s32.totalorder %s14, 0
    %p41 = por %p39, %p40
    %s42 = ssub.s32 %s8, %s15
    %p43 = scmp.eq.s32.totalorder %s42, 0
    %s45 = sadd.s32 %s44, 1
    %s46 = scalar_select %p43, %s44, %s45
    %p49 = pneg %p43
    %p50 = scmp.eq.s32.totalorder %s8, 2
    %p51 = por %p49, %p50
    %p52 = scmp.ne.s32.totalorder %s44, %s47
    %p53 = scmp.eq.s32.totalorder %s8, 0
    %p54 = por %p52, %p53
    %p55 = scmp.ne.s32.totalorder %s44, %s47
    %p56 = scmp.eq.s32.totalorder %s13, 2
    %p57 = por %p55, %p56
    %p58 = scmp.ne.s32.totalorder %s47, %s48
    %p59 = scmp.eq.s32.totalorder %s13, 0
    %p60 = por %p58, %p59
    %p61 = scmp.ne.s32.totalorder %s47, %s48
    %p62 = scmp.eq.s32.totalorder %s14, 2
    %p63 = por %p61, %p62
    %p65 = scmp.ne.s32.totalorder %s48, %s64
    %p66 = scmp.eq.s32.totalorder %s14, 0
    %p67 = por %p65, %p66
    %s68 = ssub.s32 %s8, %s15
    %p69 = scmp.eq.s32.totalorder %s68, 0
    %s71 = sadd.s32 %s70, 1
    %s72 = scalar_select %p69, %s70, %s71
    %p75 = pneg %p69
    %p76 = scmp.eq.s32.totalorder %s8, 2
    %p77 = por %p75, %p76
    %p78 = scmp.ne.s32.totalorder %s70, %s73
    %p79 = scmp.eq.s32.totalorder %s8, 0
    %p80 = por %p78, %p79
    %p81 = scmp.ne.s32.totalorder %s70, %s73
    %p82 = scmp.eq.s32.totalorder %s13, 2
    %p83 = por %p81, %p82
    %p84 = scmp.ne.s32.totalorder %s73, %s74
    %p85 = scmp.eq.s32.totalorder %s13, 0
    %p86 = por %p84, %p85
    %p87 = scmp.ne.s32.totalorder %s73, %s74
    %p88 = scmp.eq.s32.totalorder %s14, 2
    %p89 = por %p87, %p88
    %p91 = scmp.ne.s32.totalorder %s74, %s90
    %p92 = scmp.eq.s32.totalorder %s14, 0
    %p93 = por %p91, %p92
    %p94 = scmp.le.s32.totalorder 1, %s8
    %p95 = scmp.lt.s32.totalorder %s8, 4
    %p96 = pnand %p94, %p95
    %p97 = pneg %p96
    // Predicated region
    $region9: #{tpu_custom_call.1} parent=5 // pred_check
      _
    $region10: #{tpu_custom_call.1} parent=5 // pred_check_branch
      %99 = sbr.rel (%p96) target = $region12
    $region11: #{tpu_custom_call.1} parent=5 // pred_region
      %s100 = ssub.s32 %s8, 1
    $region12: #{tpu_custom_call.1} parent=5 // pred_fallthru
      _
    %p101 = scmp.lt.s32.totalorder %s8, 3
    // Predicated region
    $region13: #{tpu_custom_call.1} parent=5 // pred_check
      %p102 = pneg %p101
    $region14: #{tpu_custom_call.1} parent=5 // pred_check_branch
      %104 = sbr.rel (%p102) target = $region16
    $region15: #{tpu_custom_call.1} parent=5 // pred_region
      // Predicated region
      $region17: #{tpu_custom_call.1} parent=15 // pred_check
        %p105 = pneg %p28
      $region18: #{tpu_custom_call.1} parent=15 // pred_check_branch
        %107 = sbr.rel (%p105) target = $region20
      $region19: #{tpu_custom_call.1} parent=15 // pred_region
        %p108 = scmp.lt.s32.totalorder %s8, 2
        %s109 = scalar_select %p108, %s8, 2
        %s110 = smul.addr %s109, 8
        %s111 = scalar_lea.vmem %s0, %s110
      $region20: #{tpu_custom_call.1} parent=15 // pred_fallthru
        _
      // Predicated region
      $region21: #{tpu_custom_call.1} parent=15 // pred_check
        %p112 = pneg %p54
      $region22: #{tpu_custom_call.1} parent=15 // pred_check_branch
        %114 = sbr.rel (%p112) target = $region24
      $region23: #{tpu_custom_call.1} parent=15 // pred_region
        %p115 = scmp.lt.s32.totalorder %s8, 2
        %s116 = scalar_select %p115, %s8, 2
        %s117 = smul.addr %s116, 8
        %s118 = scalar_lea.vmem %s1, %s117
      $region24: #{tpu_custom_call.1} parent=15 // pred_fallthru
        _
    $region16: #{tpu_custom_call.1} parent=5 // pred_fallthru
      _
    %p119 = scmp.le.s32.totalorder 1, %s8
    %p120 = scmp.lt.s32.totalorder %s8, 4
    %p121 = pnand %p119, %p120
    %p122 = pneg %p121
    // Predicated region
    $region25: #{tpu_custom_call.1} parent=5 // pred_check
      _
    $region26: #{tpu_custom_call.1} parent=5 // pred_check_branch
      %124 = sbr.rel (%p121) target = $region28
    $region27: #{tpu_custom_call.1} parent=5 // pred_region
      %s125 = ssub.s32 %s8, 1
      %p126 = scmp.lt.s32.totalorder %s13, 2
      %s127 = scalar_select %p126, %s13, 2
      %s128 = smul.addr %s127, 8
      %s129 = scalar_lea.vmem %s0, %s128
      %p130 = pneg %p34
      %p131 = pneg %p31
      %p132 = scmp.lt.s32.totalorder %s13, 2
      %s133 = scalar_select %p132, %s13, 2
      %s134 = smul.addr %s133, 8
      %s135 = scalar_lea.vmem %s1, %s134
      %p136 = pneg %p60
      %p137 = pneg %p57
      %p138 = pneg %p86
      %p139 = pneg %p83
      %p140 = scmp.lt.s32.totalorder %s13, 2
      %s141 = scalar_select %p140, %s13, 2
      %s142 = scalar_lea.vmem %s2, %s141
      %p143 = scmp.lt.s32.totalorder %s13, 2
      %s144 = scalar_select %p143, %s13, 2
      %s145 = smul.addr %s144, 8
      %s146 = scalar_lea.vmem %s0, %s145
      %p147 = scmp.lt.s32.totalorder %s13, 2
      %s148 = scalar_select %p147, %s13, 2
      %s149 = smul.addr %s148, 8
      %s150 = scalar_lea.vmem %s1, %s149
      %p151 = scmp.lt.s32.totalorder %s13, 2
      %s152 = scalar_select %p151, %s13, 2
      %s153 = scalar_lea.vmem %s2, %s152
      %v154 = vld [vmem:[%s146] sm:$0xff]
      %v155 = vld [vmem:[%s150] sm:$0xff]
      %vm156 = vcmask 261120
      %v157 = vsel %vm156, %v154, -inf
      %158 = vmax.xlane.f32.xlu0 %v157
      %v159 = vpop.xlane.xlu0 %158
      %v160 = vsub.f32 %v154, %v159
      %v161 = vmul.f32 %v160, 1.442695
      %v162 = vpow.pop %v161
      %v163 = vsel %vm156, %v162, 0.0
      %164 = vadd.xlane.f32.xlu0 %v163
      %v165 = vpop.xlane.xlu0 %164
      %v166 = vlog2.pop %v165
      %v167 = vmul.f32 %v166, 0.6931472
      %v168 = vlaneseq
      %v169 = vand.u32 %v168, 127
      %170 = vset.pattern.permute.xlu0 0
      %171 = vperm.xlu0 %170, %v155
      %v172 = vpop.permute.xlu0 %171
      %vm173 = vcmp.eq.s32.totalorder %v169, %v172
      %v174 = vsel %vm173, 0.9, 0.0032258064
      %v175 = vmul.f32 %v174, %v154
      %v176 = vsel %vm156, %v175, 0.0
      %177 = vadd.xlane.f32.xlu0 %v176
      %v178 = vpop.xlane.xlu0 %177
      %v179 = vadd.f32 %v159, %v167
      %v180 = vsub.f32 %v179, %v178
      %s181 = smul.u32 %s13, 8
      %v182 = vlaneseq
      %v183 = vshrl.u32 %v182, 7
      %v184 = vstv %s181
      %v185 = vadd.s32 %v184, %v183
      %vm186 = vcmp.lt.s32.totalorder %v185, 20
      %v187 = vsel %vm186, %v180, 0.0
      %vm188 = vcmask 7168
      %v189 = vsel %vm188, %v187, 0.0
      %190 = vadd.xlane.f32.xlu0 %v189
      %v191 = vpop.xlane.xlu0 %190
      %v192 = vrot.slane %v191, 4
      %v193 = vadd.f32 %v191, %v192
      %v194 = vrot.slane %v193, 2
      %v195 = vadd.f32 %v193, %v194
      %v196 = vrot.slane %v195, 1
      %v197 = vadd.f32 %v195, %v196
      %s198 = vtos %v197
      %v199 = vstv %s198
      %vm200 = vcmask 0
      %201 = vst.msk [vmem:[%s153] sm:$0x1] %vm200, %v199
      %p202 = scmp.lt.s32.totalorder %s13, 2
      %s203 = scalar_select %p202, %s13, 2
      %s204 = scalar_lea.vmem %s2, %s203
      // Predicated region
      $region29: #{tpu_custom_call.1} parent=27 // pred_check
        %p205 = pneg %p83
      $region30: #{tpu_custom_call.1} parent=27 // pred_check_branch
        %207 = sbr.rel (%p205) target = $region32
      $region31: #{tpu_custom_call.1} parent=27 // pred_region
        _
      $region32: #{tpu_custom_call.1} parent=27 // pred_fallthru
        _
    $region28: #{tpu_custom_call.1} parent=5 // pred_fallthru
      _
    %p208 = scmp.le.s32.totalorder 2, %s8
    // Predicated region
    $region33: #{tpu_custom_call.1} parent=5 // pred_check
      %p209 = pneg %p208
    $region34: #{tpu_custom_call.1} parent=5 // pred_check_branch
      %211 = sbr.rel (%p209) target = $region36
    $region35: #{tpu_custom_call.1} parent=5 // pred_region
      %s212 = ssub.s32 %s8, 2
      // Predicated region
      $region37: #{tpu_custom_call.1} parent=35 // pred_check
        %p213 = pneg %p89
      $region38: #{tpu_custom_call.1} parent=35 // pred_check_branch
        %215 = sbr.rel (%p213) target = $region40
      $region39: #{tpu_custom_call.1} parent=35 // pred_region
        %p216 = scmp.lt.s32.totalorder %s14, 2
        %s217 = scalar_select %p216, %s14, 2
        %s218 = scalar_lea.vmem %s2, %s217
      $region40: #{tpu_custom_call.1} parent=35 // pred_fallthru
        _
    $region36: #{tpu_custom_call.1} parent=5 // pred_fallthru
      _
  $region6: #{tpu_custom_call.1} parent=0 // loop_footer
    %s12 = sadd.s32 1, %s8
  $region7: #{tpu_custom_call.1} parent=0 // loop_footer_branch
    %7 = sbr.rel target = $region3
  $region8: #{tpu_custom_call.1} parent=0 // loop_exit
    _

</llo_original>
